<compile_context>
chip_gen: v7x
topology: tpu7x:2x2x1
jax: 0.10.0
libtpu: 0.0.40
codegen_flags: <defaults>
</compile_context>

<pallas_src>
import functools

import jax
import jax.numpy as jnp
from jax.experimental import pallas as pl
from jax.experimental.pallas import tpu as pltpu


def _lstm_ln_kernel(x_ref, h0_ref, c0_ref, wih_ref, whh_ref, b_ref,
                    lnw_ref, lnb_ref,
                    out_ref, hn_ref, cn_ref,
                    h_sc, c_sc, *, hidden_dim, eps):
    """One timestep of LSTM + fused LayerNorm.

    x_ref   : (1, B, H)   current timestep input
    h0/c0   : (B, H)      initial state (loaded once at t == 0)
    wih/whh : (H, 4H)     transposed LSTM weights (gate order i, f, g, o)
    b_ref   : (1, 4H)     b_ih + b_hh
    lnw/lnb : (1, H)      LayerNorm affine params
    out_ref : (1, B, H)   normalized output for this timestep
    hn/cn   : (B, H)      final hidden / cell state (written on last step)
    h_sc/c_sc : VMEM f32 (B, H) recurrent state carried across grid steps
    """
    t = pl.program_id(0)
    H = hidden_dim

    @pl.when(t == 0)
    def _init():
        h_sc[...] = h0_ref[...].astype(jnp.float32)
        c_sc[...] = c0_ref[...].astype(jnp.float32)

    x_t = x_ref[0].astype(jnp.float32)            # (B, H)
    h_prev = h_sc[...]                            # (B, H) f32
    c_prev = c_sc[...]

    gates = (jnp.dot(x_t, wih_ref[...], preferred_element_type=jnp.float32)
             + jnp.dot(h_prev, whh_ref[...], preferred_element_type=jnp.float32)
             + b_ref[...].astype(jnp.float32))    # (B, 4H)

    i_g = jax.nn.sigmoid(gates[:, 0:H])
    f_g = jax.nn.sigmoid(gates[:, H:2 * H])
    g_g = jnp.tanh(gates[:, 2 * H:3 * H])
    o_g = jax.nn.sigmoid(gates[:, 3 * H:4 * H])

    c_t = f_g * c_prev + i_g * g_g
    h_t = o_g * jnp.tanh(c_t)
    c_sc[...] = c_t
    h_sc[...] = h_t

    # Fused LayerNorm over the hidden dim (PyTorch eps default 1e-5).
    mu = jnp.mean(h_t, axis=-1, keepdims=True)
    xc = h_t - mu
    var = jnp.mean(xc * xc, axis=-1, keepdims=True)
    y = xc * jax.lax.rsqrt(var + eps)
    y = y * lnw_ref[...].astype(jnp.float32) + lnb_ref[...].astype(jnp.float32)

    # Dropout is identity in eval mode.
    out_ref[0] = y.astype(out_ref.dtype)

    @pl.when(t == pl.num_programs(0) - 1)
    def _finalize():
        hn_ref[...] = h_t.astype(hn_ref.dtype)
        cn_ref[...] = c_t.astype(cn_ref.dtype)


def hybrid_lstm_block(x, params, hidden=None, *, eps=1e-5):
    """Forward of _HybridLSTMBlock (eval mode).

    x      : (B, S, H)
    params : dict with w_ih (4H, H), w_hh (4H, H), b_ih (4H,), b_hh (4H,),
             ln_weight (H,), ln_bias (H,)
    hidden : optional (h0, c0), each (1, B, H); zeros if None
    Returns (out (B, S, H), (h_n (1, B, H), c_n (1, B, H)))
    """
    B, S, H = x.shape

    w_ih_t = params["w_ih"].T.astype(x.dtype)               # (H, 4H)
    w_hh_t = params["w_hh"].T.astype(x.dtype)               # (H, 4H)
    bias = (params["b_ih"] + params["b_hh"]).reshape(1, 4 * H).astype(x.dtype)
    lnw = params["ln_weight"].reshape(1, H).astype(x.dtype)
    lnb = params["ln_bias"].reshape(1, H).astype(x.dtype)

    if hidden is None:
        h0 = jnp.zeros((B, H), x.dtype)
        c0 = jnp.zeros((B, H), x.dtype)
    else:
        h0 = hidden[0].reshape(B, H).astype(x.dtype)
        c0 = hidden[1].reshape(B, H).astype(x.dtype)

    x_tm = jnp.transpose(x, (1, 0, 2))                      # (S, B, H) time-major

    kernel = functools.partial(_lstm_ln_kernel, hidden_dim=H, eps=eps)

    out_tm, h_n, c_n = pl.pallas_call(
        kernel,
        out_shape=(
            jax.ShapeDtypeStruct((S, B, H), x.dtype),
            jax.ShapeDtypeStruct((B, H), x.dtype),
            jax.ShapeDtypeStruct((B, H), x.dtype),
        ),
        grid_spec=pltpu.PrefetchScalarGridSpec(
            num_scalar_prefetch=0,
            grid=(S,),
            in_specs=[
                pl.BlockSpec((1, B, H), lambda t: (t, 0, 0)),      # x_t (streamed)
                pl.BlockSpec((B, H), lambda t: (0, 0)),            # h0 (resident)
                pl.BlockSpec((B, H), lambda t: (0, 0)),            # c0 (resident)
                pl.BlockSpec((H, 4 * H), lambda t: (0, 0)),        # W_ih^T (resident)
                pl.BlockSpec((H, 4 * H), lambda t: (0, 0)),        # W_hh^T (resident)
                pl.BlockSpec((1, 4 * H), lambda t: (0, 0)),        # bias (resident)
                pl.BlockSpec((1, H), lambda t: (0, 0)),            # ln weight
                pl.BlockSpec((1, H), lambda t: (0, 0)),            # ln bias
            ],
            out_specs=[
                pl.BlockSpec((1, B, H), lambda t: (t, 0, 0)),      # normalized output
                pl.BlockSpec((B, H), lambda t: (0, 0)),            # h_n
                pl.BlockSpec((B, H), lambda t: (0, 0)),            # c_n
            ],
            scratch_shapes=[
                pltpu.VMEM((B, H), jnp.float32),                   # h state
                pltpu.VMEM((B, H), jnp.float32),                   # c state
            ],
        ),
        compiler_params=pltpu.CompilerParams(
            # Time axis is a true recurrence -> must run sequentially.
            dimension_semantics=("arbitrary",),
        ),
    )(x_tm, h0, c0, w_ih_t, w_hh_t, bias, lnw, lnb)

    out = jnp.transpose(out_tm, (1, 0, 2))                  # back to (B, S, H)
    return out, (h_n[None], c_n[None])


def hybrid_lstm_block_ref(x, params, hidden=None, eps=1e-5):
    """Pure-JAX reference: nn.LSTM (1 layer) -> nn.LayerNorm -> eval Dropout."""
    B, S, H = x.shape
    w_ih, w_hh = params["w_ih"], params["w_hh"]
    b = params["b_ih"] + params["b_hh"]
    if hidden is None:
        h = jnp.zeros((B, H), x.dtype)
        c = jnp.zeros((B, H), x.dtype)
    else:
        h = hidden[0].reshape(B, H)
        c = hidden[1].reshape(B, H)

    def step(carry, x_t):
        h, c = carry
        gates = x_t @ w_ih.T + h @ w_hh.T + b
        i = jax.nn.sigmoid(gates[:, 0:H])
        f = jax.nn.sigmoid(gates[:, H:2 * H])
        g = jnp.tanh(gates[:, 2 * H:3 * H])
        o = jax.nn.sigmoid(gates[:, 3 * H:4 * H])
        c = f * c + i * g
        h = o * jnp.tanh(c)
        return (h, c), h

    (h_n, c_n), hs = jax.lax.scan(step, (h, c), jnp.transpose(x, (1, 0, 2)))
    out = jnp.transpose(hs, (1, 0, 2))
    mu = jnp.mean(out, axis=-1, keepdims=True)
    var = jnp.mean((out - mu) ** 2, axis=-1, keepdims=True)
    y = (out - mu) * jax.lax.rsqrt(var + eps)
    y = y * params["ln_weight"] + params["ln_bias"]
    return y, (h_n[None], c_n[None])


if __name__ == "__main__":
    key = jax.random.PRNGKey(0)
    batch, seq, hidden_dim = 2, 8, 32

    k_x, k_wi, k_wh, k_bi, k_bh = jax.random.split(key, 5)
    scale = 1.0 / (hidden_dim ** 0.5)
    x = jax.random.normal(k_x, (batch, seq, hidden_dim), dtype=jnp.float32)
    params = {
        "w_ih": jax.random.uniform(k_wi, (4 * hidden_dim, hidden_dim),
                                   jnp.float32, -scale, scale),
        "w_hh": jax.random.uniform(k_wh, (4 * hidden_dim, hidden_dim),
                                   jnp.float32, -scale, scale),
        "b_ih": jax.random.uniform(k_bi, (4 * hidden_dim,),
                                   jnp.float32, -scale, scale),
        "b_hh": jax.random.uniform(k_bh, (4 * hidden_dim,),
                                   jnp.float32, -scale, scale),
        "ln_weight": jnp.ones((hidden_dim,), jnp.float32),
        "ln_bias": jnp.zeros((hidden_dim,), jnp.float32),
    }

    out, (h_n, c_n) = hybrid_lstm_block(x, params, hidden=None)
    out = jax.block_until_ready(out)
    h_n = jax.block_until_ready(h_n)
    c_n = jax.block_until_ready(c_n)

    ref_out, (ref_h, ref_c) = hybrid_lstm_block_ref(x, params, hidden=None)

    assert out.shape == (batch, seq, hidden_dim), out.shape
    assert h_n.shape == (1, batch, hidden_dim), h_n.shape
    assert c_n.shape == (1, batch, hidden_dim), c_n.shape
    assert jnp.allclose(out, ref_out, atol=1e-4, rtol=1e-4), "output mismatch"
    assert jnp.allclose(h_n, ref_h, atol=1e-4, rtol=1e-4), "h_n mismatch"
    assert jnp.allclose(c_n, ref_c, atol=1e-4, rtol=1e-4), "c_n mismatch"

    print("KERNEL_OK")
</pallas_src>

<mosaic_0001>
module attributes {stable_mosaic.version = 11 : i64} {
  func.func @_lstm_ln_kernel(%arg0: i32, %arg1: memref<1x2x32xf32, #tpu.memory_space<vmem>>, %arg2: memref<2x32xf32, #tpu.memory_space<vmem>>, %arg3: memref<2x32xf32, #tpu.memory_space<vmem>>, %arg4: memref<32x128xf32, #tpu.memory_space<vmem>>, %arg5: memref<32x128xf32, #tpu.memory_space<vmem>>, %arg6: memref<1x128xf32, #tpu.memory_space<vmem>>, %arg7: memref<1x32xf32, #tpu.memory_space<vmem>>, %arg8: memref<1x32xf32, #tpu.memory_space<vmem>>, %arg9: memref<1x2x32xf32, #tpu.memory_space<vmem>>, %arg10: memref<2x32xf32, #tpu.memory_space<vmem>>, %arg11: memref<2x32xf32, #tpu.memory_space<vmem>>, %arg12: memref<2x32xf32, #tpu.memory_space<vmem>>, %arg13: memref<2x32xf32, #tpu.memory_space<vmem>>) attributes {dimension_semantics = [#tpu.dimension_semantics<arbitrary>], iteration_bounds = array<i64: 8>, scalar_prefetch = 0 : i64, scratch_operands = 2 : i64, tpu.core_type = #tpu.core_type<tc>, window_params = [{transform_indices = @transform_0, window_bounds = array<i64: 1, 2, 32>}, {pipeline_mode = #tpu.pipeline_mode<synchronous>, transform_indices = @transform_1, window_bounds = array<i64: 2, 32>}, {pipeline_mode = #tpu.pipeline_mode<synchronous>, transform_indices = @transform_2, window_bounds = array<i64: 2, 32>}, {pipeline_mode = #tpu.pipeline_mode<synchronous>, transform_indices = @transform_3, window_bounds = array<i64: 32, 128>}, {pipeline_mode = #tpu.pipeline_mode<synchronous>, transform_indices = @transform_4, window_bounds = array<i64: 32, 128>}, {pipeline_mode = #tpu.pipeline_mode<synchronous>, transform_indices = @transform_5, window_bounds = array<i64: 1, 128>}, {pipeline_mode = #tpu.pipeline_mode<synchronous>, transform_indices = @transform_6, window_bounds = array<i64: 1, 32>}, {pipeline_mode = #tpu.pipeline_mode<synchronous>, transform_indices = @transform_7, window_bounds = array<i64: 1, 32>}, {transform_indices = @transform_8, window_bounds = array<i64: 1, 2, 32>}, {pipeline_mode = #tpu.pipeline_mode<synchronous>, transform_indices = @transform_9, window_bounds = array<i64: 2, 32>}, {pipeline_mode = #tpu.pipeline_mode<synchronous>, transform_indices = @transform_10, window_bounds = array<i64: 2, 32>}]} {
    %c0_i32 = arith.constant 0 : i32
    %0 = arith.cmpi eq, %arg0, %c0_i32 : i32
    %1 = arith.extui %0 : i1 to i32
    %c0_i32_0 = arith.constant 0 : i32
    %2 = arith.cmpi ne, %1, %c0_i32_0 : i32
    scf.if %2 {
      %c0_34 = arith.constant 0 : index
      %c0_35 = arith.constant 0 : index
      %70 = vector.load %arg2[%c0_34, %c0_35] : memref<2x32xf32, #tpu.memory_space<vmem>>, vector<2x32xf32>
      %c0_36 = arith.constant 0 : index
      %c0_37 = arith.constant 0 : index
      %71 = vector.load %arg12[%c0_36, %c0_37] : memref<2x32xf32, #tpu.memory_space<vmem>>, vector<2x32xf32>
      tpu.vector_store %arg12[%c0_36, %c0_37], %70 {strides = array<i32>} : memref<2x32xf32, #tpu.memory_space<vmem>>, vector<2x32xf32>,
      %c0_38 = arith.constant 0 : index
      %c0_39 = arith.constant 0 : index
      %72 = vector.load %arg3[%c0_38, %c0_39] : memref<2x32xf32, #tpu.memory_space<vmem>>, vector<2x32xf32>
      %c0_40 = arith.constant 0 : index
      %c0_41 = arith.constant 0 : index
      %73 = vector.load %arg13[%c0_40, %c0_41] : memref<2x32xf32, #tpu.memory_space<vmem>>, vector<2x32xf32>
      tpu.vector_store %arg13[%c0_40, %c0_41], %72 {strides = array<i32>} : memref<2x32xf32, #tpu.memory_space<vmem>>, vector<2x32xf32>,
    } else {
    }
    %c0 = arith.constant 0 : index
    %c0_1 = arith.constant 0 : index
    %c0_2 = arith.constant 0 : index
    %3 = vector.load %arg1[%c0, %c0_1, %c0_2] : memref<1x2x32xf32, #tpu.memory_space<vmem>>, vector<1x2x32xf32>
    %4 = vector.shape_cast %3 : vector<1x2x32xf32> to vector<2x32xf32>
    %c0_3 = arith.constant 0 : index
    %c0_4 = arith.constant 0 : index
    %5 = vector.load %arg12[%c0_3, %c0_4] : memref<2x32xf32, #tpu.memory_space<vmem>>, vector<2x32xf32>
    %c0_5 = arith.constant 0 : index
    %c0_6 = arith.constant 0 : index
    %6 = vector.load %arg13[%c0_5, %c0_6] : memref<2x32xf32, #tpu.memory_space<vmem>>, vector<2x32xf32>
    %c0_7 = arith.constant 0 : index
    %c0_8 = arith.constant 0 : index
    %7 = vector.load %arg4[%c0_7, %c0_8] : memref<32x128xf32, #tpu.memory_space<vmem>>, vector<32x128xf32>
    %cst = arith.constant dense<0.000000e+00> : vector<2x128xf32>
    %8 = tpu.matmul %4, %7, %cst {dimension_numbers = #tpu.dot_dimension_numbers<[1], [0], [0], [1], [0, 0, 1, 1], [], []>} : vector<2x32xf32>, vector<32x128xf32>, vector<2x128xf32> -> vector<2x128xf32>
    %c0_9 = arith.constant 0 : index
    %c0_10 = arith.constant 0 : index
    %9 = vector.load %arg5[%c0_9, %c0_10] : memref<32x128xf32, #tpu.memory_space<vmem>>, vector<32x128xf32>
    %cst_11 = arith.constant dense<0.000000e+00> : vector<2x128xf32>
    %10 = tpu.matmul %5, %9, %cst_11 {dimension_numbers = #tpu.dot_dimension_numbers<[1], [0], [0], [1], [0, 0, 1, 1], [], []>} : vector<2x32xf32>, vector<32x128xf32>, vector<2x128xf32> -> vector<2x128xf32>
    %11 = arith.addf %8, %10 : vector<2x128xf32>
    %c0_12 = arith.constant 0 : index
    %c0_13 = arith.constant 0 : index
    %12 = vector.load %arg6[%c0_12, %c0_13] : memref<1x128xf32, #tpu.memory_space<vmem>>, vector<1x128xf32>
    %13 = vector.broadcast %12 : vector<1x128xf32> to vector<2x128xf32>
    %14 = arith.addf %11, %13 : vector<2x128xf32>
    %15 = vector.extract_strided_slice %14 {offsets = [0, 0], sizes = [2, 32], strides = [1, 1]} : vector<2x128xf32> to vector<2x32xf32>
    %16 = arith.negf %15 : vector<2x32xf32>
    %17 = math.exp %16 : vector<2x32xf32>
    %cst_14 = arith.constant 1.000000e+00 : f32
    %18 = vector.broadcast %cst_14 : f32 to vector<2x32xf32>
    %19 = arith.addf %18, %17 : vector<2x32xf32>
    %20 = arith.divf %18, %19 : vector<2x32xf32>
    %21 = vector.extract_strided_slice %14 {offsets = [0, 32], sizes = [2, 32], strides = [1, 1]} : vector<2x128xf32> to vector<2x32xf32>
    %22 = arith.negf %21 : vector<2x32xf32>
    %23 = math.exp %22 : vector<2x32xf32>
    %cst_15 = arith.constant 1.000000e+00 : f32
    %24 = vector.broadcast %cst_15 : f32 to vector<2x32xf32>
    %25 = arith.addf %24, %23 : vector<2x32xf32>
    %26 = arith.divf %24, %25 : vector<2x32xf32>
    %27 = vector.extract_strided_slice %14 {offsets = [0, 64], sizes = [2, 32], strides = [1, 1]} : vector<2x128xf32> to vector<2x32xf32>
    %28 = math.tanh %27 : vector<2x32xf32>
    %29 = vector.extract_strided_slice %14 {offsets = [0, 96], sizes = [2, 32], strides = [1, 1]} : vector<2x128xf32> to vector<2x32xf32>
    %30 = arith.negf %29 : vector<2x32xf32>
    %31 = math.exp %30 : vector<2x32xf32>
    %cst_16 = arith.constant 1.000000e+00 : f32
    %32 = vector.broadcast %cst_16 : f32 to vector<2x32xf32>
    %33 = arith.addf %32, %31 : vector<2x32xf32>
    %34 = arith.divf %32, %33 : vector<2x32xf32>
    %35 = arith.mulf %26, %6 : vector<2x32xf32>
    %36 = arith.mulf %20, %28 : vector<2x32xf32>
    %37 = arith.addf %35, %36 : vector<2x32xf32>
    %38 = math.tanh %37 : vector<2x32xf32>
    %39 = arith.mulf %34, %38 : vector<2x32xf32>
    %c0_17 = arith.constant 0 : index
    %c0_18 = arith.constant 0 : index
    %40 = vector.load %arg13[%c0_17, %c0_18] : memref<2x32xf32, #tpu.memory_space<vmem>>, vector<2x32xf32>
    tpu.vector_store %arg13[%c0_17, %c0_18], %37 {strides = array<i32>} : memref<2x32xf32, #tpu.memory_space<vmem>>, vector<2x32xf32>,
    %c0_19 = arith.constant 0 : index
    %c0_20 = arith.constant 0 : index
    %41 = vector.load %arg12[%c0_19, %c0_20] : memref<2x32xf32, #tpu.memory_space<vmem>>, vector<2x32xf32>
    tpu.vector_store %arg12[%c0_19, %c0_20], %39 {strides = array<i32>} : memref<2x32xf32, #tpu.memory_space<vmem>>, vector<2x32xf32>,
    %cst_21 = arith.constant dense<0.000000e+00> : vector<2xf32>
    %42 = vector.multi_reduction <add>, %39, %cst_21 [1] : vector<2x32xf32> to vector<2xf32>
    %43 = vector.shape_cast %42 : vector<2xf32> to vector<2x1xf32>
    %cst_22 = arith.constant 3.200000e+01 : f32
    %44 = vector.broadcast %cst_22 : f32 to vector<2x1xf32>
    %45 = arith.divf %43, %44 : vector<2x1xf32>
    %46 = vector.broadcast %45 : vector<2x1xf32> to vector<2x32xf32>
    %47 = arith.subf %39, %46 : vector<2x32xf32>
    %48 = arith.mulf %47, %47 : vector<2x32xf32>
    %cst_23 = arith.constant dense<0.000000e+00> : vector<2xf32>
    %49 = vector.multi_reduction <add>, %48, %cst_23 [1] : vector<2x32xf32> to vector<2xf32>
    %50 = vector.shape_cast %49 : vector<2xf32> to vector<2x1xf32>
    %cst_24 = arith.constant 3.200000e+01 : f32
    %51 = vector.broadcast %cst_24 : f32 to vector<2x1xf32>
    %52 = arith.divf %50, %51 : vector<2x1xf32>
    %cst_25 = arith.constant 9.99999974E-6 : f32
    %53 = vector.broadcast %cst_25 : f32 to vector<2x1xf32>
    %54 = arith.addf %52, %53 : vector<2x1xf32>
    %55 = math.rsqrt %54 : vector<2x1xf32>
    %56 = vector.broadcast %55 : vector<2x1xf32> to vector<2x32xf32>
    %57 = arith.mulf %47, %56 : vector<2x32xf32>
    %c0_26 = arith.constant 0 : index
    %c0_27 = arith.constant 0 : index
    %58 = vector.load %arg7[%c0_26, %c0_27] : memref<1x32xf32, #tpu.memory_space<vmem>>, vector<1x32xf32>
    %59 = vector.broadcast %58 : vector<1x32xf32> to vector<2x32xf32>
    %60 = arith.mulf %57, %59 : vector<2x32xf32>
    %c0_28 = arith.constant 0 : index
    %c0_29 = arith.constant 0 : index
    %61 = vector.load %arg8[%c0_28, %c0_29] : memref<1x32xf32, #tpu.memory_space<vmem>>, vector<1x32xf32>
    %62 = vector.broadcast %61 : vector<1x32xf32> to vector<2x32xf32>
    %63 = arith.addf %60, %62 : vector<2x32xf32>
    %c0_30 = arith.constant 0 : index
    %c0_31 = arith.constant 0 : index
    %c0_32 = arith.constant 0 : index
    %64 = vector.load %arg9[%c0_30, %c0_31, %c0_32] : memref<1x2x32xf32, #tpu.memory_space<vmem>>, vector<1x2x32xf32>
    %65 = vector.shape_cast %64 : vector<1x2x32xf32> to vector<2x32xf32>
    %66 = vector.shape_cast %63 : vector<2x32xf32> to vector<1x2x32xf32>
    tpu.vector_store %arg9[%c0_30, %c0_31, %c0_32], %66 {strides = array<i32>} : memref<1x2x32xf32, #tpu.memory_space<vmem>>, vector<1x2x32xf32>,
    %c7_i32 = arith.constant 7 : i32
    %67 = arith.cmpi eq, %arg0, %c7_i32 : i32
    %68 = arith.extui %67 : i1 to i32
    %c0_i32_33 = arith.constant 0 : i32
    %69 = arith.cmpi ne, %68, %c0_i32_33 : i32
    scf.if %69 {
      %c0_34 = arith.constant 0 : index
      %c0_35 = arith.constant 0 : index
      %70 = vector.load %arg10[%c0_34, %c0_35] : memref<2x32xf32, #tpu.memory_space<vmem>>, vector<2x32xf32>
      tpu.vector_store %arg10[%c0_34, %c0_35], %39 {strides = array<i32>} : memref<2x32xf32, #tpu.memory_space<vmem>>, vector<2x32xf32>,
      %c0_36 = arith.constant 0 : index
      %c0_37 = arith.constant 0 : index
      %71 = vector.load %arg11[%c0_36, %c0_37] : memref<2x32xf32, #tpu.memory_space<vmem>>, vector<2x32xf32>
      tpu.vector_store %arg11[%c0_36, %c0_37], %37 {strides = array<i32>} : memref<2x32xf32, #tpu.memory_space<vmem>>, vector<2x32xf32>,
    } else {
    }
    return
  }
  func.func @transform_0(%arg0: i32) -> (i32, i32, i32) {
    %c0_i32 = arith.constant 0 : i32
    %c0_i32_0 = arith.constant 0 : i32
    %c0_i32_1 = arith.constant 0 : i32
    return %arg0, %c0_i32, %c0_i32_0 : i32, i32, i32
  }
  func.func @transform_1(%arg0: i32) -> (i32, i32) {
    %c0_i32 = arith.constant 0 : i32
    %c0_i32_0 = arith.constant 0 : i32
    %c0_i32_1 = arith.constant 0 : i32
    return %c0_i32, %c0_i32_0 : i32, i32
  }
  func.func @transform_2(%arg0: i32) -> (i32, i32) {
    %c0_i32 = arith.constant 0 : i32
    %c0_i32_0 = arith.constant 0 : i32
    %c0_i32_1 = arith.constant 0 : i32
    return %c0_i32, %c0_i32_0 : i32, i32
  }
  func.func @transform_3(%arg0: i32) -> (i32, i32) {
    %c0_i32 = arith.constant 0 : i32
    %c0_i32_0 = arith.constant 0 : i32
    %c0_i32_1 = arith.constant 0 : i32
    return %c0_i32, %c0_i32_0 : i32, i32
  }
  func.func @transform_4(%arg0: i32) -> (i32, i32) {
    %c0_i32 = arith.constant 0 : i32
    %c0_i32_0 = arith.constant 0 : i32
    %c0_i32_1 = arith.constant 0 : i32
    return %c0_i32, %c0_i32_0 : i32, i32
  }
  func.func @transform_5(%arg0: i32) -> (i32, i32) {
    %c0_i32 = arith.constant 0 : i32
    %c0_i32_0 = arith.constant 0 : i32
    %c0_i32_1 = arith.constant 0 : i32
    return %c0_i32, %c0_i32_0 : i32, i32
  }
  func.func @transform_6(%arg0: i32) -> (i32, i32) {
    %c0_i32 = arith.constant 0 : i32
    %c0_i32_0 = arith.constant 0 : i32
    %c0_i32_1 = arith.constant 0 : i32
    return %c0_i32, %c0_i32_0 : i32, i32
  }
  func.func @transform_7(%arg0: i32) -> (i32, i32) {
    %c0_i32 = arith.constant 0 : i32
    %c0_i32_0 = arith.constant 0 : i32
    %c0_i32_1 = arith.constant 0 : i32
    return %c0_i32, %c0_i32_0 : i32, i32
  }
  func.func @transform_8(%arg0: i32) -> (i32, i32, i32) {
    %c0_i32 = arith.constant 0 : i32
    %c0_i32_0 = arith.constant 0 : i32
    %c0_i32_1 = arith.constant 0 : i32
    return %arg0, %c0_i32, %c0_i32_0 : i32, i32, i32
  }
  func.func @transform_9(%arg0: i32) -> (i32, i32) {
    %c0_i32 = arith.constant 0 : i32
    %c0_i32_0 = arith.constant 0 : i32
    %c0_i32_1 = arith.constant 0 : i32
    return %c0_i32, %c0_i32_0 : i32, i32
  }
  func.func @transform_10(%arg0: i32) -> (i32, i32) {
    %c0_i32 = arith.constant 0 : i32
    %c0_i32_0 = arith.constant 0 : i32
    %c0_i32_1 = arith.constant 0 : i32
    return %c0_i32, %c0_i32_0 : i32, i32
  }
}

</mosaic_0001>

<llo_original>
// kernel: tpu_custom_call.1
$region0: #{tpu_custom_call.1}
  #allocation0 [shape = 'u32[]', space=smem, size = 0x4, offset = 0x4, fixed_abs, tag = 'smem constant byte address 0x4 - core index']
  #allocation1 [shape = 'u32[144,128]{1,0:T(1,128)}', space=vmem, size = 0x12000, scoped, tag = 'internal scratch']
  #allocation2 [shape = 'f32[2,32]{1,0:T(2,128)}', space=vmem, size = 0x400, scoped, tag = 'scratch operand']
  #allocation3 [shape = 'f32[2,32]{1,0:T(2,128)}', space=vmem, size = 0x400, scoped, tag = 'scratch operand']
  %s0 = inlined_call_operand.hbm [shape: f32[8,2,32], index: 0, kind: input, shape index: {}]
  %s1 = inlined_call_operand.vmem [shape: f32[2,32], index: 1, kind: input, shape index: {}]
  %s2 = inlined_call_operand.vmem [shape: f32[2,32], index: 2, kind: input, shape index: {}]
  %s3 = inlined_call_operand.hbm [shape: f32[32,128], index: 3, kind: input, shape index: {}]
  %s4 = inlined_call_operand.hbm [shape: f32[32,128], index: 4, kind: input, shape index: {}]
  %s5 = inlined_call_operand.vmem [shape: f32[1,128], index: 5, kind: input, shape index: {}]
  %s6 = inlined_call_operand.vmem [shape: f32[1,32], index: 6, kind: input, shape index: {}]
  %s7 = inlined_call_operand.vmem [shape: f32[1,32], index: 7, kind: input, shape index: {}]
  %s8 = inlined_call_operand.hbm [shape: f32[8,2,32], index: 8, kind: output, shape index: {0}]
  %s9 = inlined_call_operand.hbm [shape: f32[2,32], index: 9, kind: output, shape index: {1}]
  %s10 = inlined_call_operand.hbm [shape: f32[2,32], index: 10, kind: output, shape index: {2}]
  %11 = xla_tuple %s8, %s9, %s10
  %s12 = sld [smem:[#allocation0]]
  $region101: #{tpu_custom_call.1} parent=0
    _
  %s14 = ssub.s32 1, %s12
  %s15 = scalar_select 0, %s14, %s12
  $region1: #{tpu_custom_call.1} parent=0
    #allocation4 [shape = 'u8[2048]{0}', space=vmem, size = 0x800, scoped, tag = 'input window, operand 0']
    #allocation5 [shape = 's32[2]{0}', space=sflag, size = 0x8, scoped, tag = 'scoped memory for tpu_custom_call.1']
    #allocation6 [shape = 's32[2]{0}', space=sflag, size = 0x8, scoped, tag = 'scoped memory for tpu_custom_call.1']
    #allocation7 [shape = 'u8[16384]{0}', space=vmem, size = 0x4000, scoped, tag = 'input window, operand 3, single buffered']
    #allocation8 [shape = 's32[1]{0}', space=sflag, size = 0x4, scoped, tag = 'scoped memory for tpu_custom_call.1']
    #allocation9 [shape = 'u8[16384]{0}', space=vmem, size = 0x4000, scoped, tag = 'input window, operand 4, single buffered']
    #allocation10 [shape = 'u8[2048]{0}', space=vmem, size = 0x800, scoped, tag = 'output window, operand 0']
    #allocation11 [shape = 'u8[1024]{0}', space=vmem, size = 0x400, scoped, tag = 'output window, operand 1, single buffered']
    #allocation12 [shape = 's32[1]{0}', space=sflag, size = 0x4, scoped, tag = 'scoped memory for tpu_custom_call.1']
    #allocation13 [shape = 'u8[1024]{0}', space=vmem, size = 0x400, scoped, tag = 'output window, operand 2, single buffered']
    %16 = vsyncpa [#allocation5], 0
    %s17 = scalar_lea.sflag [#allocation5], 1
    %18 = vsyncpa %s17, 0
    %19 = vsyncpa [#allocation8], 0
    %20 = vsyncpa [#allocation6], 0
    %s21 = scalar_lea.sflag [#allocation6], 1
    %22 = vsyncpa %s21, 0
    %23 = vsyncpa [#allocation12], 0
    loop: start=0, step=1, limit=10
    $region2: #{tpu_custom_call.1} parent=1 // loop_pre_header
      _
    $region3: #{tpu_custom_call.1} parent=1 // loop_header
      %s25 = sphi 0, %s29
      %p26 = scmp.ge.s32.totalorder %s25, 10
      %s35 = sphi 0, %s37
      %s38 = sphi 0, %s35
      %s39 = sphi 0, %s38
      %s55 = sphi 0, %s39
      %s59 = sphi 0, %s59
      %s61 = sphi 0, %s59
      %s62 = sphi 0, %s61
      %s76 = sphi 0, %s62
      %s80 = sphi 0, %s80
      %s82 = sphi 0, %s80
      %s83 = sphi 0, %s82
      %s97 = sphi 0, %s83
      %s101 = sphi 0, %s101
      %s103 = sphi 0, %s101
      %s104 = sphi 0, %s103
      %s118 = sphi 0, %s104
      %s122 = sphi 0, %s122
      %s124 = sphi 0, %s122
      %s125 = sphi 0, %s124
      %s139 = sphi 0, %s125
      %s143 = sphi 0, %s143
      %s145 = sphi 0, %s143
      %s146 = sphi 0, %s145
      %s160 = sphi 0, %s146
      %s164 = sphi 0, %s164
      %s166 = sphi 0, %s164
      %s167 = sphi 0, %s166
      %s181 = sphi 0, %s167
      %s185 = sphi 0, %s185
      %s187 = sphi 0, %s185
      %s188 = sphi 0, %s187
      %s202 = sphi 0, %s188
      %s208 = sphi 0, %s210
      %s211 = sphi 0, %s208
      %s212 = sphi 0, %s211
      %s228 = sphi 0, %s212
      %s232 = sphi 0, %s232
      %s234 = sphi 0, %s232
      %s235 = sphi 0, %s234
      %s249 = sphi 0, %s235
      %s253 = sphi 0, %s253
      %s255 = sphi 0, %s253
      %s256 = sphi 0, %s255
      %s270 = sphi 0, %s256
    $region4: #{tpu_custom_call.1} parent=1 // loop_header_branch
      %28 = sbr.rel (%p26) target = $region8
    $region5: #{tpu_custom_call.1} parent=1 // loop_body
      %s30 = ssub.s32 %s25, 1
      %s31 = ssub.s32 %s25, 2
      %s32 = sadd.s32 %s25, 1
      %s33 = ssub.s32 %s25, %s32
      %p34 = scmp.eq.s32.totalorder %s33, 0
      %s36 = sadd.s32 %s35, 1
      %s37 = scalar_select %p34, %s35, %s36
      %p40 = pneg %p34
      %p41 = scmp.eq.s32.totalorder %s25, 7
      %p42 = por %p40, %p41
      %p43 = scmp.ne.s32.totalorder %s35, %s38
      %p44 = scmp.eq.s32.totalorder %s25, 0
      %p45 = por %p43, %p44
      %p46 = scmp.ne.s32.totalorder %s35, %s38
      %p47 = scmp.eq.s32.totalorder %s30, 7
      %p48 = por %p46, %p47
      %p49 = scmp.ne.s32.totalorder %s38, %s39
      %p50 = scmp.eq.s32.totalorder %s30, 0
      %p51 = por %p49, %p50
      %p52 = scmp.ne.s32.totalorder %s38, %s39
      %p53 = scmp.eq.s32.totalorder %s31, 7
      %p54 = por %p52, %p53
      %p56 = scmp.ne.s32.totalorder %s39, %s55
      %p57 = scmp.eq.s32.totalorder %s31, 0
      %p58 = por %p56, %p57
      %s60 = sadd.s32 %s59, 1
      %p63 = scmp.eq.s32.totalorder %s25, 7
      %p64 = scmp.ne.s32.totalorder %s59, %s61
      %p65 = scmp.eq.s32.totalorder %s25, 0
      %p66 = por %p64, %p65
      %p67 = scmp.ne.s32.totalorder %s59, %s61
      %p68 = scmp.eq.s32.totalorder %s30, 7
      %p69 = por %p67, %p68
      %p70 = scmp.ne.s32.totalorder %s61, %s62
      %p71 = scmp.eq.s32.totalorder %s30, 0
      %p72 = por %p70, %p71
      %p73 = scmp.ne.s32.totalorder %s61, %s62
      %p74 = scmp.eq.s32.totalorder %s31, 7
      %p75 = por %p73, %p74
      %p77 = scmp.ne.s32.totalorder %s62, %s76
      %p78 = scmp.eq.s32.totalorder %s31, 0
      %p79 = por %p77, %p78
      %s81 = sadd.s32 %s80, 1
      %p84 = scmp.eq.s32.totalorder %s25, 7
      %p85 = scmp.ne.s32.totalorder %s80, %s82
      %p86 = scmp.eq.s32.totalorder %s25, 0
      %p87 = por %p85, %p86
      %p88 = scmp.ne.s32.totalorder %s80, %s82
      %p89 = scmp.eq.s32.totalorder %s30, 7
      %p90 = por %p88, %p89
      %p91 = scmp.ne.s32.totalorder %s82, %s83
      %p92 = scmp.eq.s32.totalorder %s30, 0
      %p93 = por %p91, %p92
      %p94 = scmp.ne.s32.totalorder %s82, %s83
      %p95 = scmp.eq.s32.totalorder %s31, 7
      %p96 = por %p94, %p95
      %p98 = scmp.ne.s32.totalorder %s83, %s97
      %p99 = scmp.eq.s32.totalorder %s31, 0
      %p100 = por %p98, %p99
      %s102 = sadd.s32 %s101, 1
      %p105 = scmp.eq.s32.totalorder %s25, 7
      %p106 = scmp.ne.s32.totalorder %s101, %s103
      %p107 = scmp.eq.s32.totalorder %s25, 0
      %p108 = por %p106, %p107
      %p109 = scmp.ne.s32.totalorder %s101, %s103
      %p110 = scmp.eq.s32.totalorder %s30, 7
      %p111 = por %p109, %p110
      %p112 = scmp.ne.s32.totalorder %s103, %s104
      %p113 = scmp.eq.s32.totalorder %s30, 0
      %p114 = por %p112, %p113
      %p115 = scmp.ne.s32.totalorder %s103, %s104
      %p116 = scmp.eq.s32.totalorder %s31, 7
      %p117 = por %p115, %p116
      %p119 = scmp.ne.s32.totalorder %s104, %s118
      %p120 = scmp.eq.s32.totalorder %s31, 0
      %p121 = por %p119, %p120
      %s123 = sadd.s32 %s122, 1
      %p126 = scmp.eq.s32.totalorder %s25, 7
      %p127 = scmp.ne.s32.totalorder %s122, %s124
      %p128 = scmp.eq.s32.totalorder %s25, 0
      %p129 = por %p127, %p128
      %p130 = scmp.ne.s32.totalorder %s122, %s124
      %p131 = scmp.eq.s32.totalorder %s30, 7
      %p132 = por %p130, %p131
      %p133 = scmp.ne.s32.totalorder %s124, %s125
      %p134 = scmp.eq.s32.totalorder %s30, 0
      %p135 = por %p133, %p134
      %p136 = scmp.ne.s32.totalorder %s124, %s125
      %p137 = scmp.eq.s32.totalorder %s31, 7
      %p138 = por %p136, %p137
      %p140 = scmp.ne.s32.totalorder %s125, %s139
      %p141 = scmp.eq.s32.totalorder %s31, 0
      %p142 = por %p140, %p141
      %s144 = sadd.s32 %s143, 1
      %p147 = scmp.eq.s32.totalorder %s25, 7
      %p148 = scmp.ne.s32.totalorder %s143, %s145
      %p149 = scmp.eq.s32.totalorder %s25, 0
      %p150 = por %p148, %p149
      %p151 = scmp.ne.s32.totalorder %s143, %s145
      %p152 = scmp.eq.s32.totalorder %s30, 7
      %p153 = por %p151, %p152
      %p154 = scmp.ne.s32.totalorder %s145, %s146
      %p155 = scmp.eq.s32.totalorder %s30, 0
      %p156 = por %p154, %p155
      %p157 = scmp.ne.s32.totalorder %s145, %s146
      %p158 = scmp.eq.s32.totalorder %s31, 7
      %p159 = por %p157, %p158
      %p161 = scmp.ne.s32.totalorder %s146, %s160
      %p162 = scmp.eq.s32.totalorder %s31, 0
      %p163 = por %p161, %p162
      %s165 = sadd.s32 %s164, 1
      %p168 = scmp.eq.s32.totalorder %s25, 7
      %p169 = scmp.ne.s32.totalorder %s164, %s166
      %p170 = scmp.eq.s32.totalorder %s25, 0
      %p171 = por %p169, %p170
      %p172 = scmp.ne.s32.totalorder %s164, %s166
      %p173 = scmp.eq.s32.totalorder %s30, 7
      %p174 = por %p172, %p173
      %p175 = scmp.ne.s32.totalorder %s166, %s167
      %p176 = scmp.eq.s32.totalorder %s30, 0
      %p177 = por %p175, %p176
      %p178 = scmp.ne.s32.totalorder %s166, %s167
      %p179 = scmp.eq.s32.totalorder %s31, 7
      %p180 = por %p178, %p179
      %p182 = scmp.ne.s32.totalorder %s167, %s181
      %p183 = scmp.eq.s32.totalorder %s31, 0
      %p184 = por %p182, %p183
      %s186 = sadd.s32 %s185, 1
      %p189 = scmp.eq.s32.totalorder %s25, 7
      %p190 = scmp.ne.s32.totalorder %s185, %s187
      %p191 = scmp.eq.s32.totalorder %s25, 0
      %p192 = por %p190, %p191
      %p193 = scmp.ne.s32.totalorder %s185, %s187
      %p194 = scmp.eq.s32.totalorder %s30, 7
      %p195 = por %p193, %p194
      %p196 = scmp.ne.s32.totalorder %s187, %s188
      %p197 = scmp.eq.s32.totalorder %s30, 0
      %p198 = por %p196, %p197
      %p199 = scmp.ne.s32.totalorder %s187, %s188
      %p200 = scmp.eq.s32.totalorder %s31, 7
      %p201 = por %p199, %p200
      %p203 = scmp.ne.s32.totalorder %s188, %s202
      %p204 = scmp.eq.s32.totalorder %s31, 0
      %p205 = por %p203, %p204
      %s206 = ssub.s32 %s25, %s32
      %p207 = scmp.eq.s32.totalorder %s206, 0
      %s209 = sadd.s32 %s208, 1
      %s210 = scalar_select %p207, %s208, %s209
      %p213 = pneg %p207
      %p214 = scmp.eq.s32.totalorder %s25, 7
      %p215 = por %p213, %p214
      %p216 = scmp.ne.s32.totalorder %s208, %s211
      %p217 = scmp.eq.s32.totalorder %s25, 0
      %p218 = por %p216, %p217
      %p219 = scmp.ne.s32.totalorder %s208, %s211
      %p220 = scmp.eq.s32.totalorder %s30, 7
      %p221 = por %p219, %p220
      %p222 = scmp.ne.s32.totalorder %s211, %s212
      %p223 = scmp.eq.s32.totalorder %s30, 0
      %p224 = por %p222, %p223
      %p225 = scmp.ne.s32.totalorder %s211, %s212
      %p226 = scmp.eq.s32.totalorder %s31, 7
      %p227 = por %p225, %p226
      %p229 = scmp.ne.s32.totalorder %s212, %s228
      %p230 = scmp.eq.s32.totalorder %s31, 0
      %p231 = por %p229, %p230
      %s233 = sadd.s32 %s232, 1
      %p236 = scmp.eq.s32.totalorder %s25, 7
      %p237 = scmp.ne.s32.totalorder %s232, %s234
      %p238 = scmp.eq.s32.totalorder %s25, 0
      %p239 = por %p237, %p238
      %p240 = scmp.ne.s32.totalorder %s232, %s234
      %p241 = scmp.eq.s32.totalorder %s30, 7
      %p242 = por %p240, %p241
      %p243 = scmp.ne.s32.totalorder %s234, %s235
      %p244 = scmp.eq.s32.totalorder %s30, 0
      %p245 = por %p243, %p244
      %p246 = scmp.ne.s32.totalorder %s234, %s235
      %p247 = scmp.eq.s32.totalorder %s31, 7
      %p248 = por %p246, %p247
      %p250 = scmp.ne.s32.totalorder %s235, %s249
      %p251 = scmp.eq.s32.totalorder %s31, 0
      %p252 = por %p250, %p251
      %s254 = sadd.s32 %s253, 1
      %p257 = scmp.eq.s32.totalorder %s25, 7
      %p258 = scmp.ne.s32.totalorder %s253, %s255
      %p259 = scmp.eq.s32.totalorder %s25, 0
      %p260 = por %p258, %p259
      %p261 = scmp.ne.s32.totalorder %s253, %s255
      %p262 = scmp.eq.s32.totalorder %s30, 7
      %p263 = por %p261, %p262
      %p264 = scmp.ne.s32.totalorder %s255, %s256
      %p265 = scmp.eq.s32.totalorder %s30, 0
      %p266 = por %p264, %p265
      %p267 = scmp.ne.s32.totalorder %s255, %s256
      %p268 = scmp.eq.s32.totalorder %s31, 7
      %p269 = por %p267, %p268
      %p271 = scmp.ne.s32.totalorder %s256, %s270
      %p272 = scmp.eq.s32.totalorder %s31, 0
      %p273 = por %p271, %p272
      %p274 = scmp.le.s32.totalorder 1, %s25
      %p275 = scmp.lt.s32.totalorder %s25, 9
      %p276 = pnand %p274, %p275
      %p277 = pneg %p276
      // Predicated region
      $region9: #{tpu_custom_call.1} parent=5 // pred_check
        _
      $region10: #{tpu_custom_call.1} parent=5 // pred_check_branch
        %279 = sbr.rel (%p276) target = $region12
      $region11: #{tpu_custom_call.1} parent=5 // pred_region
        %s280 = ssub.s32 %s25, 1
        // Predicated region
        $region13: #{tpu_custom_call.1} parent=11 // pred_check
          %p281 = pneg %p72
        $region14: #{tpu_custom_call.1} parent=11 // pred_check_branch
          %283 = sbr.rel (%p281) target = $region16
        $region15: #{tpu_custom_call.1} parent=11 // pred_region
          _
        $region16: #{tpu_custom_call.1} parent=11 // pred_fallthru
          _
        // Predicated region
        $region17: #{tpu_custom_call.1} parent=11 // pred_check
          %p284 = pneg %p93
        $region18: #{tpu_custom_call.1} parent=11 // pred_check_branch
          %286 = sbr.rel (%p284) target = $region20
        $region19: #{tpu_custom_call.1} parent=11 // pred_region
          _
        $region20: #{tpu_custom_call.1} parent=11 // pred_fallthru
          _
        // Predicated region
        $region21: #{tpu_custom_call.1} parent=11 // pred_check
          %p287 = pneg %p114
        $region22: #{tpu_custom_call.1} parent=11 // pred_check_branch
          %289 = sbr.rel (%p287) target = $region24
        $region23: #{tpu_custom_call.1} parent=11 // pred_region
          %s291 = ssub.s32 512, 512
          %292 = vsyncadd [#allocation8], %s291
          %s293 = sshll.u32 [#allocation7], 4
          %s294 = int_to_ptr.vmem [resolvable:$true] %s293
          %299 = dma.hbm_to_vmem [thread:$0]  %s3, 512, %s294, [#allocation8], 128, 128, 8
        $region24: #{tpu_custom_call.1} parent=11 // pred_fallthru
          _
        // Predicated region
        $region25: #{tpu_custom_call.1} parent=11 // pred_check
          %p300 = pneg %p135
        $region26: #{tpu_custom_call.1} parent=11 // pred_check_branch
          %302 = sbr.rel (%p300) target = $region28
        $region27: #{tpu_custom_call.1} parent=11 // pred_region
          %s304 = ssub.s32 512, 512
          %305 = vsyncadd [#allocation8], %s304
          %s306 = sshll.u32 [#allocation9], 4
          %s307 = int_to_ptr.vmem [resolvable:$true] %s306
          %312 = dma.hbm_to_vmem [thread:$0]  %s4, 512, %s307, [#allocation8], 128, 128, 8
        $region28: #{tpu_custom_call.1} parent=11 // pred_fallthru
          _
        // Predicated region
        $region29: #{tpu_custom_call.1} parent=11 // pred_check
          %p313 = pneg %p156
        $region30: #{tpu_custom_call.1} parent=11 // pred_check_branch
          %315 = sbr.rel (%p313) target = $region32
        $region31: #{tpu_custom_call.1} parent=11 // pred_region
          _
        $region32: #{tpu_custom_call.1} parent=11 // pred_fallthru
          _
        // Predicated region
        $region33: #{tpu_custom_call.1} parent=11 // pred_check
          %p316 = pneg %p177
        $region34: #{tpu_custom_call.1} parent=11 // pred_check_branch
          %318 = sbr.rel (%p316) target = $region36
        $region35: #{tpu_custom_call.1} parent=11 // pred_region
          _
        $region36: #{tpu_custom_call.1} parent=11 // pred_fallthru
          _
        // Predicated region
        $region37: #{tpu_custom_call.1} parent=11 // pred_check
          %p319 = pneg %p198
        $region38: #{tpu_custom_call.1} parent=11 // pred_check_branch
          %321 = sbr.rel (%p319) target = $region40
        $region39: #{tpu_custom_call.1} parent=11 // pred_region
          _
        $region40: #{tpu_custom_call.1} parent=11 // pred_fallthru
          _
      $region12: #{tpu_custom_call.1} parent=5 // pred_fallthru
        _
      %p322 = scmp.lt.s32.totalorder %s25, 8
      // Predicated region
      $region41: #{tpu_custom_call.1} parent=5 // pred_check
        %p323 = pneg %p322
      $region42: #{tpu_custom_call.1} parent=5 // pred_check_branch
        %325 = sbr.rel (%p323) target = $region44
      $region43: #{tpu_custom_call.1} parent=5 // pred_region
        // Predicated region
        $region45: #{tpu_custom_call.1} parent=43 // pred_check
          %p326 = pneg %p45
        $region46: #{tpu_custom_call.1} parent=43 // pred_check_branch
          %328 = sbr.rel (%p326) target = $region48
        $region47: #{tpu_custom_call.1} parent=43 // pred_region
          %s329 = sand.u32 %s35, 1
          %s330 = scalar_lea.sflag [#allocation5], %s329
          %s331 = sand.u32 %s35, 1
          %s332 = smul.addr %s331, 2
          %s333 = scalar_lea.vmem [#allocation4], %s332
          %s335 = ssub.s32 32, 32
          %336 = vsyncadd %s330, %s335
          %s337 = smul.addr %s25, 32
          %s338 = scalar_lea.hbm %s0, %s337
          %s340 = sshll.u32 %s333, 4
          %s341 = int_to_ptr.vmem [resolvable:$true] %s340
          %343 = dma.hbm_to_vmem [thread:$0]  %s338, 32, %s341, %s330
        $region48: #{tpu_custom_call.1} parent=43 // pred_fallthru
          _
      $region44: #{tpu_custom_call.1} parent=5 // pred_fallthru
        _
      %p344 = scmp.le.s32.totalorder 1, %s25
      %p345 = scmp.lt.s32.totalorder %s25, 9
      %p346 = pnand %p344, %p345
      %p347 = pneg %p346
      // Predicated region
      $region49: #{tpu_custom_call.1} parent=5 // pred_check
        _
      $region50: #{tpu_custom_call.1} parent=5 // pred_check_branch
        %349 = sbr.rel (%p346) target = $region52
      $region51: #{tpu_custom_call.1} parent=5 // pred_region
        %s350 = ssub.s32 %s25, 1
        %s351 = sand.u32 %s38, 1
        %s352 = scalar_lea.sflag [#allocation5], %s351
        %s353 = sand.u32 %s38, 1
        %s354 = smul.addr %s353, 2
        %s355 = scalar_lea.vmem [#allocation4], %s354
        // Predicated region
        $region53: #{tpu_custom_call.1} parent=51 // pred_check
          %p356 = pneg %p51
        $region54: #{tpu_custom_call.1} parent=51 // pred_check_branch
          %358 = sbr.rel (%p356) target = $region56
        $region55: #{tpu_custom_call.1} parent=51 // pred_region
          %359 = dma.done %s352, 32
        $region56: #{tpu_custom_call.1} parent=51 // pred_fallthru
          _
        // Predicated region
        $region57: #{tpu_custom_call.1} parent=51 // pred_check
          %p360 = pneg %p114
        $region58: #{tpu_custom_call.1} parent=51 // pred_check_branch
          %362 = sbr.rel (%p360) target = $region60
        $region59: #{tpu_custom_call.1} parent=51 // pred_region
          %363 = dma.done [#allocation8], 512
        $region60: #{tpu_custom_call.1} parent=51 // pred_fallthru
          _
        // Predicated region
        $region61: #{tpu_custom_call.1} parent=51 // pred_check
          %p364 = pneg %p135
        $region62: #{tpu_custom_call.1} parent=51 // pred_check_branch
          %366 = sbr.rel (%p364) target = $region64
        $region63: #{tpu_custom_call.1} parent=51 // pred_region
          %367 = dma.done [#allocation8], 512
        $region64: #{tpu_custom_call.1} parent=51 // pred_fallthru
          _
        %s368 = sand.u32 %s38, 1
        %s369 = scalar_lea.sflag [#allocation5], %s368
        %s370 = sand.u32 %s38, 1
        %s371 = smul.addr %s370, 2
        %s372 = scalar_lea.vmem [#allocation4], %s371
        %p373 = pneg %p51
        %p374 = pneg %p48
        %p375 = pneg %p72
        %p376 = pneg %p69
        %p377 = pneg %p93
        %p378 = pneg %p90
        %p379 = pneg %p114
        %p380 = pneg %p111
        %p381 = pneg %p135
        %p382 = pneg %p132
        %p383 = pneg %p156
        %p384 = pneg %p153
        %p385 = pneg %p177
        %p386 = pneg %p174
        %p387 = pneg %p198
        %p388 = pneg %p195
        %p389 = pneg %p224
        %p390 = pneg %p221
        %s391 = sand.u32 %s211, 1
        %s392 = scalar_lea.sflag [#allocation6], %s391
        %s393 = sand.u32 %s211, 1
        %s394 = smul.addr %s393, 2
        %s395 = scalar_lea.vmem [#allocation10], %s394
        %p396 = pneg %p245
        %p397 = pneg %p242
        %p398 = pneg %p266
        %p399 = pneg %p263
        %p400 = scmp.eq.s32.totalorder %s30, 0
        // Predicated region
        $region65: #{tpu_custom_call.1} parent=51 // pred_check
          %p401 = pneg %p400
        $region66: #{tpu_custom_call.1} parent=51 // pred_check_branch
          %403 = sbr.rel (%p401) target = $region68
        $region67: #{tpu_custom_call.1} parent=51 // pred_region
          %v404 = vld [vmem:[%s1] sm:$0x3]
          %vm405 = vcmask 254976
          %406 = vst.msk [vmem:[#allocation2] sm:$0x3] %vm405, %v404
          %v407 = vld [vmem:[%s2] sm:$0x3]
          %408 = vst.msk [vmem:[#allocation3] sm:$0x3] %vm405, %v407
        $region68: #{tpu_custom_call.1} parent=51 // pred_fallthru
          _
        %v409 = vld [vmem:[%s355] sm:$0x3]
        %v410 = vld [vmem:[#allocation2] sm:$0x3]
        %v411 = vld [vmem:[#allocation3] sm:$0x3]
        %v412 = vld [vmem:[#allocation7] sm:$0xff]
        %v413 = vld [vmem:[#allocation7 + $0x8] sm:$0xff]
        %v414 = vld [vmem:[#allocation7 + $0x10] sm:$0xff]
        %v415 = vld [vmem:[#allocation7 + $0x18] sm:$0xff]
        %v416 = vld [vmem:[#allocation9] sm:$0xff]
        %v417 = vld [vmem:[#allocation9 + $0x8] sm:$0xff]
        %v418 = vld [vmem:[#allocation9 + $0x10] sm:$0xff]
        %v419 = vld [vmem:[#allocation9 + $0x18] sm:$0xff]
        %vm420 = vcmask 261120
        %v422 = vsel %vm420, %v410, 0
        %424 = vmatprep.subr.mxu0 0.0
        %425 = vmatpush1.msra.mxu0 %v416
        %426 = vmatprep.subr.mxu0 0.0
        %427 = vmatpush1.msra.mxu0 %v417
        %428 = vmatprep.subr.mxu0 0.0
        %429 = vmatpush1.msra.mxu0 %v418
        %430 = vmatprep.subr.mxu0 0.0
        %431 = vmatpush1.msra.mxu0 %v419
        %432 = vmatprep.subr.mxu0 0.0
        %433 = vmatpush1.msra.mxu0 0.0
        %434 = vmatprep.subr.mxu0 0.0
        %435 = vmatpush1.msra.mxu0 0.0
        %436 = vmatprep.subr.mxu0 0.0
        %437 = vmatpush1.msra.mxu0 0.0
        %438 = vmatprep.subr.mxu0 0.0
        %439 = vmatpush1.msra.mxu0 0.0
        %440 = vmatprep.subr.mxu0 0.0
        %441 = vmatpush1.msra.mxu0 0.0
        %442 = vmatprep.subr.mxu0 0.0
        %443 = vmatpush1.msra.mxu0 0.0
        %444 = vmatprep.subr.mxu0 0.0
        %445 = vmatpush1.msra.mxu0 0.0
        %446 = vmatprep.subr.mxu0 0.0
        %447 = vmatpush1.msra.mxu0 0.0
        %448 = vmatprep.subr.mxu0 0.0
        %449 = vmatpush1.msra.mxu0 0.0
        %450 = vmatprep.subr.mxu0 0.0
        %451 = vmatpush1.msra.mxu0 0.0
        %452 = vmatprep.subr.mxu0 0.0
        %453 = vmatpush1.msra.mxu0 0.0
        %454 = vmatprep.subr.mxu0 0.0
        %455 = vmatpush1.msra.mxu0 0.0
        %456 = vmatprep.subr.mxu0 0.0
        %457 = vmatpush1.msra.mxu0 0.0
        %458 = vmatprep.subr.mxu0 0.0
        %459 = vmatpush1.msra.mxu0 0.0
        %460 = vmatprep.subr.mxu0 0.0
        %461 = vmatpush1.msra.mxu0 0.0
        %462 = vmatprep.subr.mxu0 0.0
        %463 = vmatpush1.msra.mxu0 0.0
        %464 = vmatprep.subr.mxu0 0.0
        %465 = vmatpush1.msra.mxu0 0.0
        %466 = vmatprep.subr.mxu0 0.0
        %467 = vmatpush1.msra.mxu0 0.0
        %468 = vmatprep.subr.mxu0 0.0
        %469 = vmatpush1.msra.mxu0 0.0
        %470 = vmatprep.subr.mxu0 0.0
        %471 = vmatpush1.msra.mxu0 0.0
        %472 = vmatprep.subr.mxu0 0.0
        %473 = vmatpush1.msra.mxu0 0.0
        %474 = vmatprep.subr.mxu0 0.0
        %475 = vmatpush1.msra.mxu0 0.0
        %476 = vmatprep.subr.mxu0 0.0
        %477 = vmatpush1.msra.mxu0 0.0
        %478 = vmatprep.subr.mxu0 0.0
        %479 = vmatpush1.msra.mxu0 0.0
        %480 = vmatprep.subr.mxu0 0.0
        %481 = vmatpush1.msra.mxu0 0.0
        %482 = vmatprep.subr.mxu0 0.0
        %483 = vmatpush1.msra.mxu0 0.0
        %484 = vmatprep.subr.mxu0 0.0
        %485 = vmatpush1.msra.mxu0 0.0
        %486 = vmatprep.subr.mxu0 0.0
        %487 = vmatpush1.msra.mxu0 0.0
        %488 = vmatprep.mubr.f32.mxu0 0.0
        %489 = vmatmul.mubr.f32.gmra.mrb[0].mxu0 %v422
        %v490 = vpop.f32.mrb[0].mxu0
        %v491 = vadd.f32 0.0, %v490
        %v492 = vpop.f32.mrb[0].mxu0
        %493 = vdwg.mxu0
        %v495 = vsel %vm420, %v409, 0
        %497 = vmatprep.subr.mxu0 0.0
        %498 = vmatpush1.msra.mxu0 %v412
        %499 = vmatprep.subr.mxu0 0.0
        %500 = vmatpush1.msra.mxu0 %v413
        %501 = vmatprep.subr.mxu0 0.0
        %502 = vmatpush1.msra.mxu0 %v414
        %503 = vmatprep.subr.mxu0 0.0
        %504 = vmatpush1.msra.mxu0 %v415
        %505 = vmatprep.subr.mxu0 0.0
        %506 = vmatpush1.msra.mxu0 0.0
        %507 = vmatprep.subr.mxu0 0.0
        %508 = vmatpush1.msra.mxu0 0.0
        %509 = vmatprep.subr.mxu0 0.0
        %510 = vmatpush1.msra.mxu0 0.0
        %511 = vmatprep.subr.mxu0 0.0
        %512 = vmatpush1.msra.mxu0 0.0
        %513 = vmatprep.subr.mxu0 0.0
        %514 = vmatpush1.msra.mxu0 0.0
        %515 = vmatprep.subr.mxu0 0.0
        %516 = vmatpush1.msra.mxu0 0.0
        %517 = vmatprep.subr.mxu0 0.0
        %518 = vmatpush1.msra.mxu0 0.0
        %519 = vmatprep.subr.mxu0 0.0
        %520 = vmatpush1.msra.mxu0 0.0
        %521 = vmatprep.subr.mxu0 0.0
        %522 = vmatpush1.msra.mxu0 0.0
        %523 = vmatprep.subr.mxu0 0.0
        %524 = vmatpush1.msra.mxu0 0.0
        %525 = vmatprep.subr.mxu0 0.0
        %526 = vmatpush1.msra.mxu0 0.0
        %527 = vmatprep.subr.mxu0 0.0
        %528 = vmatpush1.msra.mxu0 0.0
        %529 = vmatprep.subr.mxu0 0.0
        %530 = vmatpush1.msra.mxu0 0.0
        %531 = vmatprep.subr.mxu0 0.0
        %532 = vmatpush1.msra.mxu0 0.0
        %533 = vmatprep.subr.mxu0 0.0
        %534 = vmatpush1.msra.mxu0 0.0
        %535 = vmatprep.subr.mxu0 0.0
        %536 = vmatpush1.msra.mxu0 0.0
        %537 = vmatprep.subr.mxu0 0.0
        %538 = vmatpush1.msra.mxu0 0.0
        %539 = vmatprep.subr.mxu0 0.0
        %540 = vmatpush1.msra.mxu0 0.0
        %541 = vmatprep.subr.mxu0 0.0
        %542 = vmatpush1.msra.mxu0 0.0
        %543 = vmatprep.subr.mxu0 0.0
        %544 = vmatpush1.msra.mxu0 0.0
        %545 = vmatprep.subr.mxu0 0.0
        %546 = vmatpush1.msra.mxu0 0.0
        %547 = vmatprep.subr.mxu0 0.0
        %548 = vmatpush1.msra.mxu0 0.0
        %549 = vmatprep.subr.mxu0 0.0
        %550 = vmatpush1.msra.mxu0 0.0
        %551 = vmatprep.subr.mxu0 0.0
        %552 = vmatpush1.msra.mxu0 0.0
        %553 = vmatprep.subr.mxu0 0.0
        %554 = vmatpush1.msra.mxu0 0.0
        %555 = vmatprep.subr.mxu0 0.0
        %556 = vmatpush1.msra.mxu0 0.0
        %557 = vmatprep.subr.mxu0 0.0
        %558 = vmatpush1.msra.mxu0 0.0
        %559 = vmatprep.subr.mxu0 0.0
        %560 = vmatpush1.msra.mxu0 0.0
        %561 = vmatprep.mubr.f32.mxu0 0.0
        %562 = vmatmul.mubr.f32.gmra.mrb[0].mxu0 %v495
        %v563 = vpop.f32.mrb[0].mxu0
        %v564 = vadd.f32 %v491, %v563
        %v565 = vpop.f32.mrb[0].mxu0
        %566 = vdwg.mxu0
        %v567 = vld [vmem:[%s5] sm:$0x1]
        %v569 = vlaneseq
        %v570 = vshrl.u32 %v569, 7
        %v571 = vsub.s32 0, %v570
        %v572 = vrot.slane %v567, %v571
        %v574 = vadd.f32 %v564, %v572
        %v575 = vxor.u32 %v574, 2147483648
        %v576 = vmul.f32 %v575, 1.442695
        %v577 = vpow.pop %v576
        %v578 = vadd.f32 %v577, 1.0
        %v579 = vrcp.pop %v578
        %v580 = vmul.f32 1.0, %v579
        %v581 = vtanh.pop %v574
        %583 = vrot.lane.b32.xlu0 %v411, 32
        %v584 = vpop.permute.xlu0 %583
        %v586 = vmul.f32 %v580, %v584
        %588 = vrot.lane.b32.xlu0 %v581, 64
        %v589 = vpop.permute.xlu0 %588
        %v591 = vmul.f32 %v580, %v589
        %593 = vrot.lane.b32.xlu0 %v591, 32
        %v594 = vpop.permute.xlu0 %593
        %v596 = vadd.f32 %v586, %v594
        %v597 = vtanh.pop %v596
        %599 = vrot.lane.b32.xlu0 %v597, 64
        %v600 = vpop.permute.xlu0 %599
        %v602 = vmul.f32 %v580, %v600
        %604 = vrot.lane.b32.xlu0 %v596, 96
        %v605 = vpop.permute.xlu0 %604
        %vm607 = vcmask 254976
        %608 = vst.msk [vmem:[#allocation3] sm:$0x3] %vm607, %v605
        %610 = vrot.lane.b32.xlu0 %v602, 32
        %v611 = vpop.permute.xlu0 %610
        %613 = vst.msk [vmem:[#allocation2] sm:$0x3] %vm607, %v611
        %v614 = vsel %vm607, %v611, 0.0
        %615 = vadd.xlane.f32.xlu0 %v614
        %v616 = vpop.xlane.xlu0 %615
        %v617 = vrcp.pop 32.0
        %v618 = vmul.f32 %v616, %v617
        %v619 = vsub.f32 %v602, %v618
        %v620 = vmul.f32 %v619, %v619
        %622 = vrot.lane.b32.xlu0 %v620, 32
        %v623 = vpop.permute.xlu0 %622
        %v625 = vsel %vm607, %v623, 0.0
        %626 = vadd.xlane.f32.xlu0 %v625
        %v627 = vpop.xlane.xlu0 %626
        %v628 = vmul.f32 %v627, %v617
        %v629 = vadd.f32 %v628, 1e-05
        %v630 = vrsqrt.pop %v629
        %v631 = vmul.f32 %v619, %v630
        %v632 = vld [vmem:[%s6] sm:$0x1]
        %v634 = vlaneseq
        %v635 = vshrl.u32 %v634, 7
        %v636 = vsub.s32 0, %v635
        %v637 = vrot.slane %v632, %v636
        %638 = vrot.lane.b32.xlu0 %v637, 96
        %v639 = vpop.permute.xlu0 %638
        %v641 = vmul.f32 %v631, %v639
        %v642 = vld [vmem:[%s7] sm:$0x1]
        %v644 = vlaneseq
        %v645 = vshrl.u32 %v644, 7
        %v646 = vsub.s32 0, %v645
        %v647 = vrot.slane %v642, %v646
        %648 = vrot.lane.b32.xlu0 %v647, 96
        %v649 = vpop.permute.xlu0 %648
        %v651 = vadd.f32 %v641, %v649
        %653 = vrot.lane.b32.xlu0 %v651, 32
        %v654 = vpop.permute.xlu0 %653
        %656 = vst.msk [vmem:[%s395] sm:$0x3] %vm607, %v654
        %p657 = scmp.eq.s32.totalorder %s30, 7
        // Predicated region
        $region69: #{tpu_custom_call.1} parent=51 // pred_check
          %p658 = pneg %p657
        $region70: #{tpu_custom_call.1} parent=51 // pred_check_branch
          %660 = sbr.rel (%p658) target = $region72
        $region71: #{tpu_custom_call.1} parent=51 // pred_region
          %661 = vst.msk [vmem:[#allocation11] sm:$0x3] %vm607, %v611
          %662 = vst.msk [vmem:[#allocation13] sm:$0x3] %vm607, %v605
        $region72: #{tpu_custom_call.1} parent=51 // pred_fallthru
          _
        %s663 = sand.u32 %s211, 1
        %s664 = scalar_lea.sflag [#allocation6], %s663
        %s665 = sand.u32 %s211, 1
        %s666 = smul.addr %s665, 2
        %s667 = scalar_lea.vmem [#allocation10], %s666
        // Predicated region
        $region73: #{tpu_custom_call.1} parent=51 // pred_check
          %p668 = pneg %p221
        $region74: #{tpu_custom_call.1} parent=51 // pred_check_branch
          %670 = sbr.rel (%p668) target = $region76
        $region75: #{tpu_custom_call.1} parent=51 // pred_region
          %s672 = ssub.s32 32, 32
          %673 = vsyncadd %s664, %s672
          %s674 = smul.addr %s30, 32
          %s675 = scalar_lea.hbm %s8, %s674
          %s677 = sshll.u32 %s667, 4
          %s678 = int_to_ptr.vmem [resolvable:$true] %s677
          %680 = dma.vmem_to_hbm [thread:$0]  %s678, 32, %s675, %s664
        $region76: #{tpu_custom_call.1} parent=51 // pred_fallthru
          _
        // Predicated region
        $region77: #{tpu_custom_call.1} parent=51 // pred_check
          %p681 = pneg %p242
        $region78: #{tpu_custom_call.1} parent=51 // pred_check_branch
          %683 = sbr.rel (%p681) target = $region80
        $region79: #{tpu_custom_call.1} parent=51 // pred_region
          %s685 = ssub.s32 32, 32
          %686 = vsyncadd [#allocation12], %s685
          %s688 = sshll.u32 [#allocation11], 4
          %s689 = int_to_ptr.vmem [resolvable:$true] %s688
          %691 = dma.vmem_to_hbm [thread:$0]  %s689, 32, %s9, [#allocation12]
        $region80: #{tpu_custom_call.1} parent=51 // pred_fallthru
          _
        // Predicated region
        $region81: #{tpu_custom_call.1} parent=51 // pred_check
          %p692 = pneg %p263
        $region82: #{tpu_custom_call.1} parent=51 // pred_check_branch
          %694 = sbr.rel (%p692) target = $region84
        $region83: #{tpu_custom_call.1} parent=51 // pred_region
          %s696 = ssub.s32 32, 32
          %697 = vsyncadd [#allocation12], %s696
          %s699 = sshll.u32 [#allocation13], 4
          %s700 = int_to_ptr.vmem [resolvable:$true] %s699
          %702 = dma.vmem_to_hbm [thread:$0]  %s700, 32, %s10, [#allocation12]
        $region84: #{tpu_custom_call.1} parent=51 // pred_fallthru
          _
        // Predicated region
        $region85: #{tpu_custom_call.1} parent=51 // pred_check
          %p703 = pneg %p242
        $region86: #{tpu_custom_call.1} parent=51 // pred_check_branch
          %705 = sbr.rel (%p703) target = $region88
        $region87: #{tpu_custom_call.1} parent=51 // pred_region
          %706 = dma.done [#allocation12], 32
        $region88: #{tpu_custom_call.1} parent=51 // pred_fallthru
          _
        // Predicated region
        $region89: #{tpu_custom_call.1} parent=51 // pred_check
          %p707 = pneg %p263
        $region90: #{tpu_custom_call.1} parent=51 // pred_check_branch
          %709 = sbr.rel (%p707) target = $region92
        $region91: #{tpu_custom_call.1} parent=51 // pred_region
          %710 = dma.done [#allocation12], 32
        $region92: #{tpu_custom_call.1} parent=51 // pred_fallthru
          _
      $region52: #{tpu_custom_call.1} parent=5 // pred_fallthru
        _
      %p711 = scmp.le.s32.totalorder 2, %s25
      // Predicated region
      $region93: #{tpu_custom_call.1} parent=5 // pred_check
        %p712 = pneg %p711
      $region94: #{tpu_custom_call.1} parent=5 // pred_check_branch
        %714 = sbr.rel (%p712) target = $region96
      $region95: #{tpu_custom_call.1} parent=5 // pred_region
        %s715 = ssub.s32 %s25, 2
        // Predicated region
        $region97: #{tpu_custom_call.1} parent=95 // pred_check
          %p716 = pneg %p227
        $region98: #{tpu_custom_call.1} parent=95 // pred_check_branch
          %718 = sbr.rel (%p716) target = $region100
        $region99: #{tpu_custom_call.1} parent=95 // pred_region
          %s719 = sand.u32 %s212, 1
          %s720 = scalar_lea.sflag [#allocation6], %s719
          %s721 = sand.u32 %s212, 1
          %s722 = smul.addr %s721, 2
          %s723 = scalar_lea.vmem [#allocation10], %s722
          %724 = dma.done %s720, 32
        $region100: #{tpu_custom_call.1} parent=95 // pred_fallthru
          _
      $region96: #{tpu_custom_call.1} parent=5 // pred_fallthru
        _
    $region6: #{tpu_custom_call.1} parent=1 // loop_footer
      %s29 = sadd.s32 1, %s25
    $region7: #{tpu_custom_call.1} parent=1 // loop_footer_branch
      %24 = sbr.rel target = $region3
    $region8: #{tpu_custom_call.1} parent=1 // loop_exit
      _
    %725 = vsyncpa [#allocation5], 1
    %s726 = scalar_lea.sflag [#allocation5], 1
    %727 = vsyncpa %s726, 1
    %728 = vsyncpa [#allocation8], 1
    %729 = vsyncpa [#allocation6], 1
    %s730 = scalar_lea.sflag [#allocation6], 1
    %731 = vsyncpa %s730, 1
    %732 = vsyncpa [#allocation12], 1

</llo_original>
